<compile_context>
chip_gen: v7x
topology: tpu7x:2x2x1
jax: 0.10.0
libtpu: 0.0.40
codegen_flags: <defaults>
</compile_context>

<pallas_src>
import functools

import jax
import jax.numpy as jnp
from jax.experimental import pallas as pl
from jax.experimental.pallas import tpu as pltpu

_LANES = 128  # TPU vreg lane width


def _round_up(x, m):
    return (x + m - 1) // m * m


def _channel_attention_kernel(x_ref, w1_ref, w2_ref, o_ref, sum_acc, max_acc,
                              *, hw, tile_hw):
    # x_ref:   (1, C, TILE_HW) one spatial tile of one batch element
    # w1_ref:  (Hid, C)        1x1 conv #1 weights (squeezed)
    # w2_ref:  (C, Hid)        1x1 conv #2 weights (squeezed)
    # o_ref:   (1, C, 1)       sigmoid(mlp(avgpool) + mlp(maxpool))
    # sum_acc: (C, 128) f32    running per-channel partial sums (lane-wide)
    # max_acc: (C, 128) f32    running per-channel partial maxes (lane-wide)
    k = pl.program_id(1)
    nk = pl.num_programs(1)

    @pl.when(k == 0)
    def _init():
        sum_acc[...] = jnp.zeros_like(sum_acc)
        max_acc[...] = jnp.full_like(max_acc, -jnp.inf)

    # Accumulate in f32 even if x is bf16.
    x = x_ref[0].astype(jnp.float32)                      # (C, TILE_HW)

    if hw % tile_hw != 0:
        # Last tile is partial (or TILE_HW > HW): mask lanes past the true HW
        # so padded/garbage data cannot corrupt the sum or the max.
        lane = jax.lax.broadcasted_iota(jnp.int32, x.shape, 1)
        valid = (k * tile_hw + lane) < hw
        xs = jnp.where(valid, x, 0.0)
        xm = jnp.where(valid, x, -jnp.inf)
    else:
        xs = x
        xm = x

    # VPU-friendly per-tile reduction: fold 128-lane-aligned slices into the
    # lane-wide accumulators (no per-step cross-lane XLU reduce, no reshape).
    for j in range(tile_hw // _LANES):
        sl = slice(j * _LANES, (j + 1) * _LANES)
        sum_acc[...] += xs[:, sl]
        max_acc[...] = jnp.maximum(max_acc[...], xm[:, sl])

    @pl.when(k == nk - 1)
    def _finalize():
        # Single cross-lane collapse per batch element.
        avg = jnp.sum(sum_acc[...], axis=-1, keepdims=True) * (1.0 / hw)  # (C,1)
        mx = jnp.max(max_acc[...], axis=-1, keepdims=True)                # (C,1)
        # Shared MLP applied to both pooled vectors in one pass (runs once per
        # batch element, off the per-tile critical path).
        p = jnp.concatenate([avg, mx], axis=1)                            # (C,2)
        h = jnp.dot(w1_ref[...], p, preferred_element_type=jnp.float32)   # (Hid,2)
        h = jnp.maximum(h, 0.0)
        y = jnp.dot(w2_ref[...], h, preferred_element_type=jnp.float32)   # (C,2)
        s = y[:, 0:1] + y[:, 1:2]                                         # (C,1)
        # Note: this narrow store happens once per batch element only.
        o_ref[0] = jax.nn.sigmoid(s).astype(o_ref.dtype)


def channel_attention(x, w1, w2, *, tile_hw=None):
    """x: (B, C, H, W); w1: (Hid, C); w2: (C, Hid). Returns (B, C, 1, 1)."""
    B, C, H, W = x.shape
    HW = H * W
    hid = w1.shape[0]
    x_flat = x.reshape(B, C, HW)  # free: contiguous reshape, no HBM copy

    if tile_hw is None:
        # Keep a single input buffer around <= 4 MiB so the double-buffered
        # input plus (C,128) accumulators fit comfortably under the scoped
        # VMEM defaults on every generation (v5e 16 MiB, v6e/v7x 32 MiB,
        # v7x physical 64 MiB).  512-4096 lanes per row already saturates the
        # HBM pipeline, so cap at 4096.
        budget_bytes = 4 * 1024 * 1024
        max_t = max(_LANES,
                    (budget_bytes // (C * x.dtype.itemsize)) // _LANES * _LANES)
        tile_hw = min(_round_up(HW, _LANES), max_t, 4096)
    assert tile_hw % _LANES == 0, "tile_hw must be a multiple of 128"

    grid = (B, pl.cdiv(HW, tile_hw))
    kernel = functools.partial(_channel_attention_kernel, hw=HW, tile_hw=tile_hw)

    out = pl.pallas_call(
        kernel,
        out_shape=jax.ShapeDtypeStruct((B, C, 1), x.dtype),
        grid_spec=pltpu.PrefetchScalarGridSpec(
            num_scalar_prefetch=0,
            grid=grid,
            in_specs=[
                pl.BlockSpec((1, C, tile_hw), lambda b, k: (b, 0, k)),
                pl.BlockSpec((hid, C), lambda b, k: (0, 0)),
                pl.BlockSpec((C, hid), lambda b, k: (0, 0)),
            ],
            out_specs=pl.BlockSpec((1, C, 1), lambda b, k: (b, 0, 0)),
            scratch_shapes=[
                pltpu.VMEM((C, _LANES), jnp.float32),  # running sum
                pltpu.VMEM((C, _LANES), jnp.float32),  # running max
            ],
        ),
        compiler_params=pltpu.CompilerParams(
            dimension_semantics=("parallel", "arbitrary"),
            vmem_limit_bytes=32 * 1024 * 1024,
        ),
    )(x_flat, w1, w2)
    return out.reshape(B, C, 1, 1)


def channel_attention_ref(x, w1, w2):
    """Pure-JAX reference matching the PyTorch module semantics."""
    avg = jnp.mean(x, axis=(2, 3))                    # (B, C)
    mx = jnp.max(x, axis=(2, 3))                      # (B, C)

    def mlp(p):  # p: (B, C)
        h = jnp.maximum(p @ w1.T, 0.0)                # (B, Hid)
        return h @ w2.T                               # (B, C)

    out = jax.nn.sigmoid(mlp(avg) + mlp(mx))          # (B, C)
    return out[:, :, None, None]


if __name__ == "__main__":
    # Small shapes consistent with the module: in_channels divisible by the
    # reduction ratio; C=32, ratio=4 -> hidden=8.
    B, C, H, W = 2, 32, 16, 16
    ratio = 4
    hid = C // ratio

    key = jax.random.PRNGKey(0)
    kx, k1, k2 = jax.random.split(key, 3)
    x = jax.random.normal(kx, (B, C, H, W), dtype=jnp.float32)
    # Conv2d(C, hid, 1, bias=False) weight (hid, C, 1, 1) -> (hid, C)
    w1 = jax.random.normal(k1, (hid, C), dtype=jnp.float32) * 0.1
    # Conv2d(hid, C, 1, bias=False) weight (C, hid, 1, 1) -> (C, hid)
    w2 = jax.random.normal(k2, (C, hid), dtype=jnp.float32) * 0.1

    out = jax.block_until_ready(channel_attention(x, w1, w2))
    ref = channel_attention_ref(x, w1, w2)
    assert out.shape == (B, C, 1, 1), out.shape
    assert jnp.allclose(out, ref, atol=1e-5, rtol=1e-5), "mismatch vs reference"

    # Also exercise the multi-tile + ragged (HW not a multiple of TILE_HW) path.
    x2 = jax.random.normal(kx, (B, C, 20, 20), dtype=jnp.float32)  # HW = 400
    out2 = jax.block_until_ready(channel_attention(x2, w1, w2, tile_hw=256))
    ref2 = channel_attention_ref(x2, w1, w2)
    assert jnp.allclose(out2, ref2, atol=1e-5, rtol=1e-5), "mismatch (tiled path)"

    print("KERNEL_OK")
</pallas_src>

<mosaic_0001>
module attributes {stable_mosaic.version = 11 : i64} {
  func.func @_channel_attention_kernel(%arg0: i32, %arg1: i32, %arg2: memref<1x32x256xf32, #tpu.memory_space<vmem>>, %arg3: memref<8x32xf32, #tpu.memory_space<vmem>>, %arg4: memref<32x8xf32, #tpu.memory_space<vmem>>, %arg5: memref<1x32x1xf32, #tpu.memory_space<vmem>>, %arg6: memref<32x128xf32, #tpu.memory_space<vmem>>, %arg7: memref<32x128xf32, #tpu.memory_space<vmem>>) attributes {dimension_semantics = [#tpu.dimension_semantics<parallel>, #tpu.dimension_semantics<arbitrary>], iteration_bounds = array<i64: 2, 1>, scalar_prefetch = 0 : i64, scratch_operands = 2 : i64, tpu.core_type = #tpu.core_type<tc>, window_params = [{transform_indices = @transform_0, window_bounds = array<i64: 1, 32, 256>}, {pipeline_mode = #tpu.pipeline_mode<synchronous>, transform_indices = @transform_1, window_bounds = array<i64: 8, 32>}, {pipeline_mode = #tpu.pipeline_mode<synchronous>, transform_indices = @transform_2, window_bounds = array<i64: 32, 8>}, {transform_indices = @transform_3, window_bounds = array<i64: 1, 32, 1>}]} {
    %c0_i32 = arith.constant 0 : i32
    %0 = arith.cmpi eq, %arg1, %c0_i32 : i32
    %1 = arith.extui %0 : i1 to i32
    %c0_i32_0 = arith.constant 0 : i32
    %2 = arith.cmpi ne, %1, %c0_i32_0 : i32
    scf.if %2 {
      %cst = arith.constant 0.000000e+00 : f32
      %24 = vector.broadcast %cst : f32 to vector<32x128xf32>
      %c0_21 = arith.constant 0 : index
      %c0_22 = arith.constant 0 : index
      %25 = vector.load %arg6[%c0_21, %c0_22] : memref<32x128xf32, #tpu.memory_space<vmem>>, vector<32x128xf32>
      tpu.vector_store %arg6[%c0_21, %c0_22], %24 {strides = array<i32>} : memref<32x128xf32, #tpu.memory_space<vmem>>, vector<32x128xf32>,
      %cst_23 = arith.constant 0xFF800000 : f32
      %26 = vector.broadcast %cst_23 : f32 to vector<32x128xf32>
      %c0_24 = arith.constant 0 : index
      %c0_25 = arith.constant 0 : index
      %27 = vector.load %arg7[%c0_24, %c0_25] : memref<32x128xf32, #tpu.memory_space<vmem>>, vector<32x128xf32>
      tpu.vector_store %arg7[%c0_24, %c0_25], %26 {strides = array<i32>} : memref<32x128xf32, #tpu.memory_space<vmem>>, vector<32x128xf32>,
    } else {
    }
    %c0 = arith.constant 0 : index
    %c0_1 = arith.constant 0 : index
    %c0_2 = arith.constant 0 : index
    %3 = vector.load %arg2[%c0, %c0_1, %c0_2] : memref<1x32x256xf32, #tpu.memory_space<vmem>>, vector<1x32x256xf32>
    %4 = vector.shape_cast %3 : vector<1x32x256xf32> to vector<32x256xf32>
    %c0_3 = arith.constant 0 : index
    %c0_4 = arith.constant 0 : index
    %5 = vector.load %arg6[%c0_3, %c0_4] : memref<32x128xf32, #tpu.memory_space<vmem>>, vector<32x128xf32>
    %6 = vector.extract_strided_slice %4 {offsets = [0, 0], sizes = [32, 128], strides = [1, 1]} : vector<32x256xf32> to vector<32x128xf32>
    %7 = arith.addf %5, %6 : vector<32x128xf32>
    %c0_5 = arith.constant 0 : index
    %c0_6 = arith.constant 0 : index
    %8 = vector.load %arg6[%c0_5, %c0_6] : memref<32x128xf32, #tpu.memory_space<vmem>>, vector<32x128xf32>
    tpu.vector_store %arg6[%c0_5, %c0_6], %7 {strides = array<i32>} : memref<32x128xf32, #tpu.memory_space<vmem>>, vector<32x128xf32>,
    %c0_7 = arith.constant 0 : index
    %c0_8 = arith.constant 0 : index
    %9 = vector.load %arg7[%c0_7, %c0_8] : memref<32x128xf32, #tpu.memory_space<vmem>>, vector<32x128xf32>
    %10 = vector.extract_strided_slice %4 {offsets = [0, 0], sizes = [32, 128], strides = [1, 1]} : vector<32x256xf32> to vector<32x128xf32>
    %11 = arith.maximumf %9, %10 : vector<32x128xf32>
    %c0_9 = arith.constant 0 : index
    %c0_10 = arith.constant 0 : index
    %12 = vector.load %arg7[%c0_9, %c0_10] : memref<32x128xf32, #tpu.memory_space<vmem>>, vector<32x128xf32>
    tpu.vector_store %arg7[%c0_9, %c0_10], %11 {strides = array<i32>} : memref<32x128xf32, #tpu.memory_space<vmem>>, vector<32x128xf32>,
    %c0_11 = arith.constant 0 : index
    %c0_12 = arith.constant 0 : index
    %13 = vector.load %arg6[%c0_11, %c0_12] : memref<32x128xf32, #tpu.memory_space<vmem>>, vector<32x128xf32>
    %14 = vector.extract_strided_slice %4 {offsets = [0, 128], sizes = [32, 128], strides = [1, 1]} : vector<32x256xf32> to vector<32x128xf32>
    %15 = arith.addf %13, %14 : vector<32x128xf32>
    %c0_13 = arith.constant 0 : index
    %c0_14 = arith.constant 0 : index
    %16 = vector.load %arg6[%c0_13, %c0_14] : memref<32x128xf32, #tpu.memory_space<vmem>>, vector<32x128xf32>
    tpu.vector_store %arg6[%c0_13, %c0_14], %15 {strides = array<i32>} : memref<32x128xf32, #tpu.memory_space<vmem>>, vector<32x128xf32>,
    %c0_15 = arith.constant 0 : index
    %c0_16 = arith.constant 0 : index
    %17 = vector.load %arg7[%c0_15, %c0_16] : memref<32x128xf32, #tpu.memory_space<vmem>>, vector<32x128xf32>
    %18 = vector.extract_strided_slice %4 {offsets = [0, 128], sizes = [32, 128], strides = [1, 1]} : vector<32x256xf32> to vector<32x128xf32>
    %19 = arith.maximumf %17, %18 : vector<32x128xf32>
    %c0_17 = arith.constant 0 : index
    %c0_18 = arith.constant 0 : index
    %20 = vector.load %arg7[%c0_17, %c0_18] : memref<32x128xf32, #tpu.memory_space<vmem>>, vector<32x128xf32>
    tpu.vector_store %arg7[%c0_17, %c0_18], %19 {strides = array<i32>} : memref<32x128xf32, #tpu.memory_space<vmem>>, vector<32x128xf32>,
    %c0_i32_19 = arith.constant 0 : i32
    %21 = arith.cmpi eq, %arg1, %c0_i32_19 : i32
    %22 = arith.extui %21 : i1 to i32
    %c0_i32_20 = arith.constant 0 : i32
    %23 = arith.cmpi ne, %22, %c0_i32_20 : i32
    scf.if %23 {
      %c0_21 = arith.constant 0 : index
      %c0_22 = arith.constant 0 : index
      %24 = vector.load %arg6[%c0_21, %c0_22] : memref<32x128xf32, #tpu.memory_space<vmem>>, vector<32x128xf32>
      %cst = arith.constant dense<0.000000e+00> : vector<32xf32>
      %25 = vector.multi_reduction <add>, %24, %cst [1] : vector<32x128xf32> to vector<32xf32>
      %26 = vector.shape_cast %25 : vector<32xf32> to vector<32x1xf32>
      %cst_23 = arith.constant 3.906250e-03 : f32
      %27 = vector.broadcast %cst_23 : f32 to vector<32x1xf32>
      %28 = arith.mulf %26, %27 : vector<32x1xf32>
      %c0_24 = arith.constant 0 : index
      %c0_25 = arith.constant 0 : index
      %29 = vector.load %arg7[%c0_24, %c0_25] : memref<32x128xf32, #tpu.memory_space<vmem>>, vector<32x128xf32>
      %cst_26 = arith.constant dense<0xFF800000> : vector<32xf32>
      %30 = vector.multi_reduction <maximumf>, %29, %cst_26 [1] : vector<32x128xf32> to vector<32xf32>
      %31 = vector.shape_cast %30 : vector<32xf32> to vector<32x1xf32>
      %32 = tpu.concatenate %28, %31 in 1 : vector<32x1xf32>, vector<32x1xf32> -> vector<32x2xf32>
      %c0_27 = arith.constant 0 : index
      %c0_28 = arith.constant 0 : index
      %33 = vector.load %arg3[%c0_27, %c0_28] : memref<8x32xf32, #tpu.memory_space<vmem>>, vector<8x32xf32>
      %cst_29 = arith.constant dense<0.000000e+00> : vector<8x2xf32>
      %34 = tpu.matmul %33, %32, %cst_29 {dimension_numbers = #tpu.dot_dimension_numbers<[1], [0], [0], [1], [0, 0, 1, 1], [], []>} : vector<8x32xf32>, vector<32x2xf32>, vector<8x2xf32> -> vector<8x2xf32>
      %cst_30 = arith.constant 0.000000e+00 : f32
      %35 = vector.broadcast %cst_30 : f32 to vector<8x2xf32>
      %36 = arith.maximumf %34, %35 : vector<8x2xf32>
      %c0_31 = arith.constant 0 : index
      %c0_32 = arith.constant 0 : index
      %37 = vector.load %arg4[%c0_31, %c0_32] : memref<32x8xf32, #tpu.memory_space<vmem>>, vector<32x8xf32>
      %cst_33 = arith.constant dense<0.000000e+00> : vector<32x2xf32>
      %38 = tpu.matmul %37, %36, %cst_33 {dimension_numbers = #tpu.dot_dimension_numbers<[1], [0], [0], [1], [0, 0, 1, 1], [], []>} : vector<32x8xf32>, vector<8x2xf32>, vector<32x2xf32> -> vector<32x2xf32>
      %39 = vector.extract_strided_slice %38 {offsets = [0, 0], sizes = [32, 1], strides = [1, 1]} : vector<32x2xf32> to vector<32x1xf32>
      %40 = vector.extract_strided_slice %38 {offsets = [0, 1], sizes = [32, 1], strides = [1, 1]} : vector<32x2xf32> to vector<32x1xf32>
      %41 = arith.addf %39, %40 : vector<32x1xf32>
      %42 = arith.negf %41 : vector<32x1xf32>
      %43 = math.exp %42 : vector<32x1xf32>
      %cst_34 = arith.constant 1.000000e+00 : f32
      %44 = vector.broadcast %cst_34 : f32 to vector<32x1xf32>
      %45 = arith.addf %44, %43 : vector<32x1xf32>
      %46 = arith.divf %44, %45 : vector<32x1xf32>
      %c0_35 = arith.constant 0 : index
      %c0_36 = arith.constant 0 : index
      %c0_37 = arith.constant 0 : index
      %47 = vector.load %arg5[%c0_35, %c0_36, %c0_37] : memref<1x32x1xf32, #tpu.memory_space<vmem>>, vector<1x32x1xf32>
      %48 = vector.shape_cast %47 : vector<1x32x1xf32> to vector<32x1xf32>
      %49 = vector.shape_cast %46 : vector<32x1xf32> to vector<1x32x1xf32>
      tpu.vector_store %arg5[%c0_35, %c0_36, %c0_37], %49 {strides = array<i32>} : memref<1x32x1xf32, #tpu.memory_space<vmem>>, vector<1x32x1xf32>,
    } else {
    }
    return
  }
  func.func @transform_0(%arg0: i32, %arg1: i32) -> (i32, i32, i32) {
    %c0_i32 = arith.constant 0 : i32
    %c0_i32_0 = arith.constant 0 : i32
    return %arg0, %c0_i32, %arg1 : i32, i32, i32
  }
  func.func @transform_1(%arg0: i32, %arg1: i32) -> (i32, i32) {
    %c0_i32 = arith.constant 0 : i32
    %c0_i32_0 = arith.constant 0 : i32
    %c0_i32_1 = arith.constant 0 : i32
    return %c0_i32, %c0_i32_0 : i32, i32
  }
  func.func @transform_2(%arg0: i32, %arg1: i32) -> (i32, i32) {
    %c0_i32 = arith.constant 0 : i32
    %c0_i32_0 = arith.constant 0 : i32
    %c0_i32_1 = arith.constant 0 : i32
    return %c0_i32, %c0_i32_0 : i32, i32
  }
  func.func @transform_3(%arg0: i32, %arg1: i32) -> (i32, i32, i32) {
    %c0_i32 = arith.constant 0 : i32
    %c0_i32_0 = arith.constant 0 : i32
    %c0_i32_1 = arith.constant 0 : i32
    return %arg0, %c0_i32, %c0_i32_0 : i32, i32, i32
  }
}

</mosaic_0001>

<llo_original>
// kernel: tpu_custom_call.1
$region0: #{tpu_custom_call.1}
  #allocation0 [shape = 'u32[]', space=smem, size = 0x4, offset = 0x4, fixed_abs, tag = 'smem constant byte address 0x4 - core index']
  #allocation1 [shape = 'u32[144,128]{1,0:T(1,128)}', space=vmem, size = 0x12000, scoped, tag = 'internal scratch']
  #allocation2 [shape = 'f32[32,128]{1,0:T(8,128)}', space=vmem, size = 0x4000, scoped, tag = 'scratch operand']
  #allocation3 [shape = 'f32[32,128]{1,0:T(8,128)}', space=vmem, size = 0x4000, scoped, tag = 'scratch operand']
  %s0 = inlined_call_operand.hbm [shape: f32[2,32,256], index: 0, kind: input, shape index: {}]
  %s1 = inlined_call_operand.vmem [shape: f32[8,32], index: 1, kind: input, shape index: {}]
  %s2 = inlined_call_operand.vmem [shape: f32[32,8], index: 2, kind: input, shape index: {}]
  %s3 = inlined_call_operand.vmem [shape: f32[2,32,1], index: 3, kind: output, shape index: {}]
  %s4 = sld [smem:[#allocation0]]
  $region57: #{tpu_custom_call.1} parent=0
    _
  %s6 = ssub.s32 1, %s4
  %s7 = scalar_select 0, %s6, %s4
  $region1: #{tpu_custom_call.1} parent=0
    #allocation4 [shape = 'u8[65536]{0}', space=vmem, size = 0x10000, scoped, tag = 'input window, operand 0']
    #allocation5 [shape = 's32[2]{0}', space=sflag, size = 0x8, scoped, tag = 'scoped memory for tpu_custom_call.1']
    %8 = vsyncpa [#allocation5], 0
    %s9 = scalar_lea.sflag [#allocation5], 1
    %10 = vsyncpa %s9, 0
    loop: start=0, step=1, limit=4
    $region2: #{tpu_custom_call.1} parent=1 // loop_pre_header
      _
    $region3: #{tpu_custom_call.1} parent=1 // loop_header
      %s12 = sphi 0, %s16
      %p13 = scmp.ge.s32.totalorder %s12, 4
      %s19 = sphi 0, %s31
      %s20 = sphi 0, %s27
      %s21 = sphi 0, %s19
      %s22 = sphi 0, %s20
      %s23 = sphi 0, %s21
      %s24 = sphi 0, %s22
      %s36 = sphi 0, %s38
      %s39 = sphi 0, %s36
      %s40 = sphi 0, %s39
      %s56 = sphi 0, %s40
      %s60 = sphi 0, %s60
      %s62 = sphi 0, %s60
      %s63 = sphi 0, %s62
      %s77 = sphi 0, %s63
      %s81 = sphi 0, %s81
      %s83 = sphi 0, %s81
      %s84 = sphi 0, %s83
      %s98 = sphi 0, %s84
      %s104 = sphi 0, %s106
      %s107 = sphi 0, %s104
      %s108 = sphi 0, %s107
      %s124 = sphi 0, %s108
    $region4: #{tpu_custom_call.1} parent=1 // loop_header_branch
      %15 = sbr.rel (%p13) target = $region8
    $region5: #{tpu_custom_call.1} parent=1 // loop_body
      %s17 = ssub.s32 %s12, 1
      %s18 = ssub.s32 %s12, 2
      %s25 = sadd.s32 1, %s20
      %p26 = scmp.ge.s32.totalorder %s25, 1
      %s27 = scalar_select %p26, 0, %s25
      %s28 = sadd.s32 1, %s19
      %s29 = scalar_select %p26, %s28, %s19
      %p30 = scmp.ge.s32.totalorder %s29, 2
      %s31 = scalar_select %p30, 0, %s29
      %s32 = ssub.s32 %s19, %s31
      %s33 = ssub.s32 %s20, %s27
      %s34 = sor.u32 %s32, %s33
      %p35 = scmp.eq.s32.totalorder %s34, 0
      %s37 = sadd.s32 %s36, 1
      %s38 = scalar_select %p35, %s36, %s37
      %p41 = pneg %p35
      %p42 = scmp.eq.s32.totalorder %s12, 1
      %p43 = por %p41, %p42
      %p44 = scmp.ne.s32.totalorder %s36, %s39
      %p45 = scmp.eq.s32.totalorder %s12, 0
      %p46 = por %p44, %p45
      %p47 = scmp.ne.s32.totalorder %s36, %s39
      %p48 = scmp.eq.s32.totalorder %s17, 1
      %p49 = por %p47, %p48
      %p50 = scmp.ne.s32.totalorder %s39, %s40
      %p51 = scmp.eq.s32.totalorder %s17, 0
      %p52 = por %p50, %p51
      %p53 = scmp.ne.s32.totalorder %s39, %s40
      %p54 = scmp.eq.s32.totalorder %s18, 1
      %p55 = por %p53, %p54
      %p57 = scmp.ne.s32.totalorder %s40, %s56
      %p58 = scmp.eq.s32.totalorder %s18, 0
      %p59 = por %p57, %p58
      %s61 = sadd.s32 %s60, 1
      %p64 = scmp.eq.s32.totalorder %s12, 1
      %p65 = scmp.ne.s32.totalorder %s60, %s62
      %p66 = scmp.eq.s32.totalorder %s12, 0
      %p67 = por %p65, %p66
      %p68 = scmp.ne.s32.totalorder %s60, %s62
      %p69 = scmp.eq.s32.totalorder %s17, 1
      %p70 = por %p68, %p69
      %p71 = scmp.ne.s32.totalorder %s62, %s63
      %p72 = scmp.eq.s32.totalorder %s17, 0
      %p73 = por %p71, %p72
      %p74 = scmp.ne.s32.totalorder %s62, %s63
      %p75 = scmp.eq.s32.totalorder %s18, 1
      %p76 = por %p74, %p75
      %p78 = scmp.ne.s32.totalorder %s63, %s77
      %p79 = scmp.eq.s32.totalorder %s18, 0
      %p80 = por %p78, %p79
      %s82 = sadd.s32 %s81, 1
      %p85 = scmp.eq.s32.totalorder %s12, 1
      %p86 = scmp.ne.s32.totalorder %s81, %s83
      %p87 = scmp.eq.s32.totalorder %s12, 0
      %p88 = por %p86, %p87
      %p89 = scmp.ne.s32.totalorder %s81, %s83
      %p90 = scmp.eq.s32.totalorder %s17, 1
      %p91 = por %p89, %p90
      %p92 = scmp.ne.s32.totalorder %s83, %s84
      %p93 = scmp.eq.s32.totalorder %s17, 0
      %p94 = por %p92, %p93
      %p95 = scmp.ne.s32.totalorder %s83, %s84
      %p96 = scmp.eq.s32.totalorder %s18, 1
      %p97 = por %p95, %p96
      %p99 = scmp.ne.s32.totalorder %s84, %s98
      %p100 = scmp.eq.s32.totalorder %s18, 0
      %p101 = por %p99, %p100
      %s102 = ssub.s32 %s19, %s31
      %p103 = scmp.eq.s32.totalorder %s102, 0
      %s105 = sadd.s32 %s104, 1
      %s106 = scalar_select %p103, %s104, %s105
      %p109 = pneg %p103
      %p110 = scmp.eq.s32.totalorder %s12, 1
      %p111 = por %p109, %p110
      %p112 = scmp.ne.s32.totalorder %s104, %s107
      %p113 = scmp.eq.s32.totalorder %s12, 0
      %p114 = por %p112, %p113
      %p115 = scmp.ne.s32.totalorder %s104, %s107
      %p116 = scmp.eq.s32.totalorder %s17, 1
      %p117 = por %p115, %p116
      %p118 = scmp.ne.s32.totalorder %s107, %s108
      %p119 = scmp.eq.s32.totalorder %s17, 0
      %p120 = por %p118, %p119
      %p121 = scmp.ne.s32.totalorder %s107, %s108
      %p122 = scmp.eq.s32.totalorder %s18, 1
      %p123 = por %p121, %p122
      %p125 = scmp.ne.s32.totalorder %s108, %s124
      %p126 = scmp.eq.s32.totalorder %s18, 0
      %p127 = por %p125, %p126
      %p128 = scmp.le.s32.totalorder 1, %s12
      %p129 = scmp.lt.s32.totalorder %s12, 3
      %p130 = pnand %p128, %p129
      %p131 = pneg %p130
      // Predicated region
      $region9: #{tpu_custom_call.1} parent=5 // pred_check
        _
      $region10: #{tpu_custom_call.1} parent=5 // pred_check_branch
        %133 = sbr.rel (%p130) target = $region12
      $region11: #{tpu_custom_call.1} parent=5 // pred_region
        %s134 = ssub.s32 %s12, 1
        // Predicated region
        $region13: #{tpu_custom_call.1} parent=11 // pred_check
          %p135 = pneg %p73
        $region14: #{tpu_custom_call.1} parent=11 // pred_check_branch
          %137 = sbr.rel (%p135) target = $region16
        $region15: #{tpu_custom_call.1} parent=11 // pred_region
          _
        $region16: #{tpu_custom_call.1} parent=11 // pred_fallthru
          _
        // Predicated region
        $region17: #{tpu_custom_call.1} parent=11 // pred_check
          %p138 = pneg %p94
        $region18: #{tpu_custom_call.1} parent=11 // pred_check_branch
          %140 = sbr.rel (%p138) target = $region20
        $region19: #{tpu_custom_call.1} parent=11 // pred_region
          _
        $region20: #{tpu_custom_call.1} parent=11 // pred_fallthru
          _
      $region12: #{tpu_custom_call.1} parent=5 // pred_fallthru
        _
      %p141 = scmp.lt.s32.totalorder %s12, 2
      // Predicated region
      $region21: #{tpu_custom_call.1} parent=5 // pred_check
        %p142 = pneg %p141
      $region22: #{tpu_custom_call.1} parent=5 // pred_check_branch
        %144 = sbr.rel (%p142) target = $region24
      $region23: #{tpu_custom_call.1} parent=5 // pred_region
        // Predicated region
        $region25: #{tpu_custom_call.1} parent=23 // pred_check
          %p145 = pneg %p46
        $region26: #{tpu_custom_call.1} parent=23 // pred_check_branch
          %147 = sbr.rel (%p145) target = $region28
        $region27: #{tpu_custom_call.1} parent=23 // pred_region
          %s148 = sand.u32 %s36, 1
          %s149 = scalar_lea.sflag [#allocation5], %s148
          %s150 = sand.u32 %s36, 1
          %s151 = smul.addr %s150, 64
          %s152 = scalar_lea.vmem [#allocation4], %s151
          %s153 = smul.u32 2, %s20
          %s155 = ssub.s32 1024, 1024
          %156 = vsyncadd %s149, %s155
          %s157 = smul.addr %s19, 8
          %s158 = sadd.s32 %s153, %s157
          %s159 = smul.addr %s158, 128
          %s160 = scalar_lea.hbm %s0, %s159
          %s161 = sshll.u32 %s152, 4
          %s162 = int_to_ptr.vmem [resolvable:$true] %s161
          %167 = dma.hbm_to_vmem [thread:$0]  %s160, 1024, %s162, %s149, 256, 256, 16
        $region28: #{tpu_custom_call.1} parent=23 // pred_fallthru
          _
      $region24: #{tpu_custom_call.1} parent=5 // pred_fallthru
        _
      %p168 = scmp.le.s32.totalorder 1, %s12
      %p169 = scmp.lt.s32.totalorder %s12, 3
      %p170 = pnand %p168, %p169
      %p171 = pneg %p170
      // Predicated region
      $region29: #{tpu_custom_call.1} parent=5 // pred_check
        _
      $region30: #{tpu_custom_call.1} parent=5 // pred_check_branch
        %173 = sbr.rel (%p170) target = $region32
      $region31: #{tpu_custom_call.1} parent=5 // pred_region
        %s174 = ssub.s32 %s12, 1
        %s175 = sand.u32 %s39, 1
        %s176 = scalar_lea.sflag [#allocation5], %s175
        %s177 = sand.u32 %s39, 1
        %s178 = smul.addr %s177, 64
        %s179 = scalar_lea.vmem [#allocation4], %s178
        // Predicated region
        $region33: #{tpu_custom_call.1} parent=31 // pred_check
          %p180 = pneg %p52
        $region34: #{tpu_custom_call.1} parent=31 // pred_check_branch
          %182 = sbr.rel (%p180) target = $region36
        $region35: #{tpu_custom_call.1} parent=31 // pred_region
          %183 = dma.done %s176, 1024
        $region36: #{tpu_custom_call.1} parent=31 // pred_fallthru
          _
        %s184 = sand.u32 %s39, 1
        %s185 = scalar_lea.sflag [#allocation5], %s184
        %s186 = sand.u32 %s39, 1
        %s187 = smul.addr %s186, 64
        %s188 = scalar_lea.vmem [#allocation4], %s187
        %p189 = pneg %p52
        %p190 = pneg %p49
        %p191 = pneg %p73
        %p192 = pneg %p70
        %p193 = pneg %p94
        %p194 = pneg %p91
        %p195 = pneg %p120
        %p196 = pneg %p117
        %p197 = scmp.lt.s32.totalorder %s21, 1
        %s198 = scalar_select %p197, %s21, 1
        %s199 = smul.addr %s198, 4
        %s200 = smul.addr %s199, 8
        %s201 = scalar_lea.vmem %s3, %s200
        %s202 = smul.u32 2, %s22
        %p203 = scmp.lt.s32.totalorder %s21, 1
        %s204 = scalar_select %p203, %s21, 1
        %s205 = smul.addr %s204, 4
        %s206 = smul.addr %s205, 8
        %s207 = scalar_lea.vmem %s3, %s206
        %p208 = scmp.eq.s32.totalorder %s22, 0
        // Predicated region
        $region37: #{tpu_custom_call.1} parent=31 // pred_check
          %p209 = pneg %p208
        $region38: #{tpu_custom_call.1} parent=31 // pred_check_branch
          %211 = sbr.rel (%p209) target = $region40
        $region39: #{tpu_custom_call.1} parent=31 // pred_region
          %212 = vst [vmem:[#allocation2] sm:$0xff] 0.0
          %213 = vst [vmem:[#allocation2 + $0x8] sm:$0xff] 0.0
          %214 = vst [vmem:[#allocation2 + $0x10] sm:$0xff] 0.0
          %215 = vst [vmem:[#allocation2 + $0x18] sm:$0xff] 0.0
          %216 = vst [vmem:[#allocation3] sm:$0xff] -inf
          %217 = vst [vmem:[#allocation3 + $0x8] sm:$0xff] -inf
          %218 = vst [vmem:[#allocation3 + $0x10] sm:$0xff] -inf
          %219 = vst [vmem:[#allocation3 + $0x18] sm:$0xff] -inf
        $region40: #{tpu_custom_call.1} parent=31 // pred_fallthru
          _
        %v220 = vld [vmem:[%s179] sm:$0xff]
        %v221 = vld [vmem:[%s179 + $0x8] sm:$0xff]
        %v222 = vld [vmem:[%s179 + $0x10] sm:$0xff]
        %v223 = vld [vmem:[%s179 + $0x18] sm:$0xff]
        %v224 = vld [vmem:[%s179 + $0x20] sm:$0xff]
        %v225 = vld [vmem:[%s179 + $0x28] sm:$0xff]
        %v226 = vld [vmem:[%s179 + $0x30] sm:$0xff]
        %v227 = vld [vmem:[%s179 + $0x38] sm:$0xff]
        %v228 = vld [vmem:[#allocation2] sm:$0xff]
        %v229 = vld [vmem:[#allocation2 + $0x8] sm:$0xff]
        %v230 = vld [vmem:[#allocation2 + $0x10] sm:$0xff]
        %v231 = vld [vmem:[#allocation2 + $0x18] sm:$0xff]
        %v232 = vadd.f32 %v228, %v220
        %v233 = vadd.f32 %v229, %v222
        %v234 = vadd.f32 %v230, %v224
        %v235 = vadd.f32 %v231, %v226
        %236 = vst [vmem:[#allocation2] sm:$0xff] %v232
        %237 = vst [vmem:[#allocation2 + $0x8] sm:$0xff] %v233
        %238 = vst [vmem:[#allocation2 + $0x10] sm:$0xff] %v234
        %239 = vst [vmem:[#allocation2 + $0x18] sm:$0xff] %v235
        %v240 = vld [vmem:[#allocation3] sm:$0xff]
        %v241 = vld [vmem:[#allocation3 + $0x8] sm:$0xff]
        %v242 = vld [vmem:[#allocation3 + $0x10] sm:$0xff]
        %v243 = vld [vmem:[#allocation3 + $0x18] sm:$0xff]
        %v244 = vmax.f32 %v240, %v220
        %v245 = vmax.f32 %v241, %v222
        %v246 = vmax.f32 %v242, %v224
        %v247 = vmax.f32 %v243, %v226
        %248 = vst [vmem:[#allocation3] sm:$0xff] %v244
        %249 = vst [vmem:[#allocation3 + $0x8] sm:$0xff] %v245
        %250 = vst [vmem:[#allocation3 + $0x10] sm:$0xff] %v246
        %251 = vst [vmem:[#allocation3 + $0x18] sm:$0xff] %v247
        %v252 = vld [vmem:[#allocation2] sm:$0xff]
        %v253 = vld [vmem:[#allocation2 + $0x8] sm:$0xff]
        %v254 = vld [vmem:[#allocation2 + $0x10] sm:$0xff]
        %v255 = vld [vmem:[#allocation2 + $0x18] sm:$0xff]
        %v256 = vadd.f32 %v252, %v221
        %v257 = vadd.f32 %v253, %v223
        %v258 = vadd.f32 %v254, %v225
        %v259 = vadd.f32 %v255, %v227
        %260 = vst [vmem:[#allocation2] sm:$0xff] %v256
        %261 = vst [vmem:[#allocation2 + $0x8] sm:$0xff] %v257
        %262 = vst [vmem:[#allocation2 + $0x10] sm:$0xff] %v258
        %263 = vst [vmem:[#allocation2 + $0x18] sm:$0xff] %v259
        %v264 = vld [vmem:[#allocation3] sm:$0xff]
        %v265 = vld [vmem:[#allocation3 + $0x8] sm:$0xff]
        %v266 = vld [vmem:[#allocation3 + $0x10] sm:$0xff]
        %v267 = vld [vmem:[#allocation3 + $0x18] sm:$0xff]
        %v268 = vmax.f32 %v264, %v221
        %v269 = vmax.f32 %v265, %v223
        %v270 = vmax.f32 %v266, %v225
        %v271 = vmax.f32 %v267, %v227
        %272 = vst [vmem:[#allocation3] sm:$0xff] %v268
        %273 = vst [vmem:[#allocation3 + $0x8] sm:$0xff] %v269
        %274 = vst [vmem:[#allocation3 + $0x10] sm:$0xff] %v270
        %275 = vst [vmem:[#allocation3 + $0x18] sm:$0xff] %v271
        // Predicated region
        $region41: #{tpu_custom_call.1} parent=31 // pred_check
          %p276 = pneg %p208
        $region42: #{tpu_custom_call.1} parent=31 // pred_check_branch
          %278 = sbr.rel (%p276) target = $region44
        $region43: #{tpu_custom_call.1} parent=31 // pred_region
          %v279 = vld [vmem:[#allocation2] sm:$0xff]
          %v280 = vld [vmem:[#allocation2 + $0x8] sm:$0xff]
          %v281 = vld [vmem:[#allocation2 + $0x10] sm:$0xff]
          %v282 = vld [vmem:[#allocation2 + $0x18] sm:$0xff]
          %283 = vadd.xlane.f32.xlu0 %v279
          %v284 = vpop.xlane.xlu0 %283
          %285 = vadd.xlane.f32.xlu0 %v280
          %v286 = vpop.xlane.xlu0 %285
          %287 = vadd.xlane.f32.xlu0 %v281
          %v288 = vpop.xlane.xlu0 %287
          %289 = vadd.xlane.f32.xlu0 %v282
          %v290 = vpop.xlane.xlu0 %289
          %v291 = vmul.f32 %v284, 0.00390625
          %v292 = vmul.f32 %v286, 0.00390625
          %v293 = vmul.f32 %v288, 0.00390625
          %v294 = vmul.f32 %v290, 0.00390625
          %v295 = vld [vmem:[#allocation3] sm:$0xff]
          %v296 = vld [vmem:[#allocation3 + $0x8] sm:$0xff]
          %v297 = vld [vmem:[#allocation3 + $0x10] sm:$0xff]
          %v298 = vld [vmem:[#allocation3 + $0x18] sm:$0xff]
          %299 = vmax.xlane.f32.xlu0 %v295
          %v300 = vpop.xlane.xlu0 %299
          %301 = vmax.xlane.f32.xlu0 %v296
          %v302 = vpop.xlane.xlu0 %301
          %303 = vmax.xlane.f32.xlu0 %v297
          %v304 = vpop.xlane.xlu0 %303
          %305 = vmax.xlane.f32.xlu0 %v298
          %v306 = vpop.xlane.xlu0 %305
          %vm307 = vcmask 7168
          %v308 = vsel %vm307, %v291, %v300
          %v309 = vsel %vm307, %v292, %v302
          %v310 = vsel %vm307, %v293, %v304
          %v311 = vsel %vm307, %v294, %v306
          %v312 = vld [vmem:[%s1] sm:$0xff]
          %vm313 = vcmask 261120
          %v315 = vsel %vm313, %v312, 0
          %317 = vmatprep.subr.mxu0 0.0
          %318 = vmatpush1.msra.mxu0 %v308
          %319 = vmatprep.subr.mxu0 0.0
          %320 = vmatpush1.msra.mxu0 %v309
          %321 = vmatprep.subr.mxu0 0.0
          %322 = vmatpush1.msra.mxu0 %v310
          %323 = vmatprep.subr.mxu0 0.0
          %324 = vmatpush1.msra.mxu0 %v311
          %325 = vmatprep.subr.mxu0 0.0
          %326 = vmatpush1.msra.mxu0 0.0
          %327 = vmatprep.subr.mxu0 0.0
          %328 = vmatpush1.msra.mxu0 0.0
          %329 = vmatprep.subr.mxu0 0.0
          %330 = vmatpush1.msra.mxu0 0.0
          %331 = vmatprep.subr.mxu0 0.0
          %332 = vmatpush1.msra.mxu0 0.0
          %333 = vmatprep.subr.mxu0 0.0
          %334 = vmatpush1.msra.mxu0 0.0
          %335 = vmatprep.subr.mxu0 0.0
          %336 = vmatpush1.msra.mxu0 0.0
          %337 = vmatprep.subr.mxu0 0.0
          %338 = vmatpush1.msra.mxu0 0.0
          %339 = vmatprep.subr.mxu0 0.0
          %340 = vmatpush1.msra.mxu0 0.0
          %341 = vmatprep.subr.mxu0 0.0
          %342 = vmatpush1.msra.mxu0 0.0
          %343 = vmatprep.subr.mxu0 0.0
          %344 = vmatpush1.msra.mxu0 0.0
          %345 = vmatprep.subr.mxu0 0.0
          %346 = vmatpush1.msra.mxu0 0.0
          %347 = vmatprep.subr.mxu0 0.0
          %348 = vmatpush1.msra.mxu0 0.0
          %349 = vmatprep.subr.mxu0 0.0
          %350 = vmatpush1.msra.mxu0 0.0
          %351 = vmatprep.subr.mxu0 0.0
          %352 = vmatpush1.msra.mxu0 0.0
          %353 = vmatprep.subr.mxu0 0.0
          %354 = vmatpush1.msra.mxu0 0.0
          %355 = vmatprep.subr.mxu0 0.0
          %356 = vmatpush1.msra.mxu0 0.0
          %357 = vmatprep.subr.mxu0 0.0
          %358 = vmatpush1.msra.mxu0 0.0
          %359 = vmatprep.subr.mxu0 0.0
          %360 = vmatpush1.msra.mxu0 0.0
          %361 = vmatprep.subr.mxu0 0.0
          %362 = vmatpush1.msra.mxu0 0.0
          %363 = vmatprep.subr.mxu0 0.0
          %364 = vmatpush1.msra.mxu0 0.0
          %365 = vmatprep.subr.mxu0 0.0
          %366 = vmatpush1.msra.mxu0 0.0
          %367 = vmatprep.subr.mxu0 0.0
          %368 = vmatpush1.msra.mxu0 0.0
          %369 = vmatprep.subr.mxu0 0.0
          %370 = vmatpush1.msra.mxu0 0.0
          %371 = vmatprep.subr.mxu0 0.0
          %372 = vmatpush1.msra.mxu0 0.0
          %373 = vmatprep.subr.mxu0 0.0
          %374 = vmatpush1.msra.mxu0 0.0
          %375 = vmatprep.subr.mxu0 0.0
          %376 = vmatpush1.msra.mxu0 0.0
          %377 = vmatprep.subr.mxu0 0.0
          %378 = vmatpush1.msra.mxu0 0.0
          %379 = vmatprep.subr.mxu0 0.0
          %380 = vmatpush1.msra.mxu0 0.0
          %381 = vmatprep.mubr.f32.mxu0 0.0
          %382 = vmatmul.mubr.f32.gmra.mrb[0].mxu0 %v315
          %v383 = vpop.f32.mrb[0].mxu0
          %v384 = vadd.f32 0.0, %v383
          %v385 = vpop.f32.mrb[0].mxu0
          %386 = vdwg.mxu0
          %v387 = vmax.f32 %v384, 0.0
          %v388 = vld [vmem:[%s2] sm:$0xff]
          %v389 = vld [vmem:[%s2 + $0x8] sm:$0xff]
          %v390 = vld [vmem:[%s2 + $0x10] sm:$0xff]
          %v391 = vld [vmem:[%s2 + $0x18] sm:$0xff]
          %vm392 = vcmask 64512
          %v394 = vsel %vm392, %v388, 0
          %v397 = vsel %vm392, %v389, 0
          %v400 = vsel %vm392, %v390, 0
          %v403 = vsel %vm392, %v391, 0
          %405 = vmatprep.subr.mxu0 0.0
          %406 = vmatpush1.msra.mxu0 %v387
          %407 = vmatprep.subr.mxu0 0.0
          %408 = vmatpush1.msra.mxu0 0.0
          %409 = vmatprep.subr.mxu0 0.0
          %410 = vmatpush1.msra.mxu0 0.0
          %411 = vmatprep.subr.mxu0 0.0
          %412 = vmatpush1.msra.mxu0 0.0
          %413 = vmatprep.subr.mxu0 0.0
          %414 = vmatpush1.msra.mxu0 0.0
          %415 = vmatprep.subr.mxu0 0.0
          %416 = vmatpush1.msra.mxu0 0.0
          %417 = vmatprep.subr.mxu0 0.0
          %418 = vmatpush1.msra.mxu0 0.0
          %419 = vmatprep.subr.mxu0 0.0
          %420 = vmatpush1.msra.mxu0 0.0
          %421 = vmatprep.subr.mxu0 0.0
          %422 = vmatpush1.msra.mxu0 0.0
          %423 = vmatprep.subr.mxu0 0.0
          %424 = vmatpush1.msra.mxu0 0.0
          %425 = vmatprep.subr.mxu0 0.0
          %426 = vmatpush1.msra.mxu0 0.0
          %427 = vmatprep.subr.mxu0 0.0
          %428 = vmatpush1.msra.mxu0 0.0
          %429 = vmatprep.subr.mxu0 0.0
          %430 = vmatpush1.msra.mxu0 0.0
          %431 = vmatprep.subr.mxu0 0.0
          %432 = vmatpush1.msra.mxu0 0.0
          %433 = vmatprep.subr.mxu0 0.0
          %434 = vmatpush1.msra.mxu0 0.0
          %435 = vmatprep.subr.mxu0 0.0
          %436 = vmatpush1.msra.mxu0 0.0
          %437 = vmatprep.subr.mxu0 0.0
          %438 = vmatpush1.msra.mxu0 0.0
          %439 = vmatprep.subr.mxu0 0.0
          %440 = vmatpush1.msra.mxu0 0.0
          %441 = vmatprep.subr.mxu0 0.0
          %442 = vmatpush1.msra.mxu0 0.0
          %443 = vmatprep.subr.mxu0 0.0
          %444 = vmatpush1.msra.mxu0 0.0
          %445 = vmatprep.subr.mxu0 0.0
          %446 = vmatpush1.msra.mxu0 0.0
          %447 = vmatprep.subr.mxu0 0.0
          %448 = vmatpush1.msra.mxu0 0.0
          %449 = vmatprep.subr.mxu0 0.0
          %450 = vmatpush1.msra.mxu0 0.0
          %451 = vmatprep.subr.mxu0 0.0
          %452 = vmatpush1.msra.mxu0 0.0
          %453 = vmatprep.subr.mxu0 0.0
          %454 = vmatpush1.msra.mxu0 0.0
          %455 = vmatprep.subr.mxu0 0.0
          %456 = vmatpush1.msra.mxu0 0.0
          %457 = vmatprep.subr.mxu0 0.0
          %458 = vmatpush1.msra.mxu0 0.0
          %459 = vmatprep.subr.mxu0 0.0
          %460 = vmatpush1.msra.mxu0 0.0
          %461 = vmatprep.subr.mxu0 0.0
          %462 = vmatpush1.msra.mxu0 0.0
          %463 = vmatprep.subr.mxu0 0.0
          %464 = vmatpush1.msra.mxu0 0.0
          %465 = vmatprep.subr.mxu0 0.0
          %466 = vmatpush1.msra.mxu0 0.0
          %467 = vmatprep.subr.mxu0 0.0
          %468 = vmatpush1.msra.mxu0 0.0
          %469 = vmatprep.mubr.f32.mxu0 0.0
          %470 = vmatmul.mubr.f32.gmra.mrb[0].mxu0 %v394
          %v471 = vpop.f32.mrb[0].mxu0
          %v472 = vadd.f32 0.0, %v471
          %v473 = vpop.f32.mrb[0].mxu0
          %474 = vmatprep.mubr.f32.mxu0 0.0
          %475 = vmatmul.mubr.f32.gmra.mrb[0].mxu0 %v397
          %v476 = vpop.f32.mrb[0].mxu0
          %v477 = vadd.f32 0.0, %v476
          %v478 = vpop.f32.mrb[0].mxu0
          %479 = vmatprep.mubr.f32.mxu0 0.0
          %480 = vmatmul.mubr.f32.gmra.mrb[0].mxu0 %v400
          %v481 = vpop.f32.mrb[0].mxu0
          %v482 = vadd.f32 0.0, %v481
          %v483 = vpop.f32.mrb[0].mxu0
          %484 = vmatprep.mubr.f32.mxu0 0.0
          %485 = vmatmul.mubr.f32.gmra.mrb[0].mxu0 %v403
          %v486 = vpop.f32.mrb[0].mxu0
          %v487 = vadd.f32 0.0, %v486
          %v488 = vpop.f32.mrb[0].mxu0
          %489 = vdwg.mxu0
          %494 = vrot.lane.b32.xlu0 %v472, 127
          %v495 = vpop.permute.xlu0 %494
          %496 = vrot.lane.b32.xlu0 %v477, 127
          %v497 = vpop.permute.xlu0 %496
          %498 = vrot.lane.b32.xlu0 %v482, 127
          %v499 = vpop.permute.xlu0 %498
          %500 = vrot.lane.b32.xlu0 %v487, 127
          %v501 = vpop.permute.xlu0 %500
          %v506 = vadd.f32 %v472, %v495
          %v507 = vadd.f32 %v477, %v497
          %v508 = vadd.f32 %v482, %v499
          %v509 = vadd.f32 %v487, %v501
          %v510 = vxor.u32 %v506, 2147483648
          %v511 = vxor.u32 %v507, 2147483648
          %v512 = vxor.u32 %v508, 2147483648
          %v513 = vxor.u32 %v509, 2147483648
          %v514 = vmul.f32 %v510, 1.442695
          %v515 = vpow.pop %v514
          %v516 = vmul.f32 %v511, 1.442695
          %v517 = vpow.pop %v516
          %v518 = vmul.f32 %v512, 1.442695
          %v519 = vpow.pop %v518
          %v520 = vmul.f32 %v513, 1.442695
          %v521 = vpow.pop %v520
          %v522 = vadd.f32 %v515, 1.0
          %v523 = vadd.f32 %v517, 1.0
          %v524 = vadd.f32 %v519, 1.0
          %v525 = vadd.f32 %v521, 1.0
          %v526 = vrcp.pop %v522
          %v527 = vmul.f32 1.0, %v526
          %v528 = vrcp.pop %v523
          %v529 = vmul.f32 1.0, %v528
          %v530 = vrcp.pop %v524
          %v531 = vmul.f32 1.0, %v530
          %v532 = vrcp.pop %v525
          %v533 = vmul.f32 1.0, %v532
          %534 = vst.msk [vmem:[%s207] sm:$0xff] %vm307, %v527
          %535 = vst.msk [vmem:[%s207 + $0x8] sm:$0xff] %vm307, %v529
          %536 = vst.msk [vmem:[%s207 + $0x10] sm:$0xff] %vm307, %v531
          %537 = vst.msk [vmem:[%s207 + $0x18] sm:$0xff] %vm307, %v533
        $region44: #{tpu_custom_call.1} parent=31 // pred_fallthru
          _
        %p538 = scmp.lt.s32.totalorder %s21, 1
        %s539 = scalar_select %p538, %s21, 1
        %s540 = smul.addr %s539, 4
        %s541 = smul.addr %s540, 8
        %s542 = scalar_lea.vmem %s3, %s541
        // Predicated region
        $region45: #{tpu_custom_call.1} parent=31 // pred_check
          %p543 = pneg %p117
        $region46: #{tpu_custom_call.1} parent=31 // pred_check_branch
          %545 = sbr.rel (%p543) target = $region48
        $region47: #{tpu_custom_call.1} parent=31 // pred_region
          _
        $region48: #{tpu_custom_call.1} parent=31 // pred_fallthru
          _
      $region32: #{tpu_custom_call.1} parent=5 // pred_fallthru
        _
      %p546 = scmp.le.s32.totalorder 2, %s12
      // Predicated region
      $region49: #{tpu_custom_call.1} parent=5 // pred_check
        %p547 = pneg %p546
      $region50: #{tpu_custom_call.1} parent=5 // pred_check_branch
        %549 = sbr.rel (%p547) target = $region52
      $region51: #{tpu_custom_call.1} parent=5 // pred_region
        %s550 = ssub.s32 %s12, 2
        // Predicated region
        $region53: #{tpu_custom_call.1} parent=51 // pred_check
          %p551 = pneg %p123
        $region54: #{tpu_custom_call.1} parent=51 // pred_check_branch
          %553 = sbr.rel (%p551) target = $region56
        $region55: #{tpu_custom_call.1} parent=51 // pred_region
          %p554 = scmp.lt.s32.totalorder %s23, 1
          %s555 = scalar_select %p554, %s23, 1
          %s556 = smul.addr %s555, 4
          %s557 = smul.addr %s556, 8
          %s558 = scalar_lea.vmem %s3, %s557
        $region56: #{tpu_custom_call.1} parent=51 // pred_fallthru
          _
      $region52: #{tpu_custom_call.1} parent=5 // pred_fallthru
        _
    $region6: #{tpu_custom_call.1} parent=1 // loop_footer
      %s16 = sadd.s32 1, %s12
    $region7: #{tpu_custom_call.1} parent=1 // loop_footer_branch
      %11 = sbr.rel target = $region3
    $region8: #{tpu_custom_call.1} parent=1 // loop_exit
      _
    %559 = vsyncpa [#allocation5], 1
    %s560 = scalar_lea.sflag [#allocation5], 1
    %561 = vsyncpa %s560, 1

</llo_original>
